<compile_context>
chip_gen: v5e
topology: v5e:2x2
jax: 0.10.0
libtpu: 0.0.40
codegen_flags: <defaults>
</compile_context>

<pallas_src>
import functools

import jax
import jax.numpy as jnp
from jax.experimental import pallas as pl
from jax.experimental.pallas import tpu as pltpu


def _round_up(x, m):
    return (x + m - 1) // m * m


def cosbert_kernel(x_ref, w1_ref, b1_ref, w2_ref, b2_ref, w3_ref, b3_ref, o_ref,
                   *, compute_dtype):
    # In-kernel narrow cast for the MXU; f32 accumulation, f32 bias-add / ReLU.
    x = x_ref[...].astype(compute_dtype)
    # Layer 1: Linear(384 -> 256) + ReLU
    h1 = jnp.dot(x, w1_ref[...], preferred_element_type=jnp.float32) + b1_ref[...]
    h1 = jnp.maximum(h1, 0.0)
    # Layer 2: Linear(256 -> 128) + ReLU
    h2 = jnp.dot(h1.astype(compute_dtype), w2_ref[...],
                 preferred_element_type=jnp.float32) + b2_ref[...]
    h2 = jnp.maximum(h2, 0.0)
    # Layer 3: Linear(128 -> 128_padded); columns >= 52 are zero-padded.
    out = jnp.dot(h2.astype(compute_dtype), w3_ref[...],
                  preferred_element_type=jnp.float32) + b3_ref[...]
    o_ref[...] = out.astype(o_ref.dtype)


def cosbert_forward(x, params, *, tile_b=2048, compute_dtype=jnp.bfloat16,
                    out_dtype=None, return_padded=False):
    """x: [B, 384]. params: dict (w1,b1,w2,b2,w3,b3), weights stored [in, out].

    tile_b:        batch rows per grid step (rounded to a multiple of 16).
    compute_dtype: MXU input dtype (bf16; fp8 possible on v7x).
    out_dtype:     output dtype (default: x.dtype).  Pass bf16 to halve the
                   store stream if the consumer tolerates it.
    return_padded: if True, return the raw (B_pad, 128) kernel output and skip
                   the slice copy (consumer must take [:, :52] itself).
    """
    orig_dtype = x.dtype
    out_dtype = orig_dtype if out_dtype is None else out_dtype
    B, D_in = x.shape
    w1, b1, w2, b2, w3, b3 = (params[k] for k in ("w1", "b1", "w2", "b2", "w3", "b3"))
    H1, H2, D_out = w1.shape[1], w2.shape[1], w3.shape[1]

    # ---- lane-dense output: pad D_out (52) up to a multiple of 128 ----------
    D_out_p = max(128, _round_up(D_out, 128))
    if D_out_p != D_out:
        w3 = jnp.pad(w3, ((0, 0), (0, D_out_p - D_out)))
        b3 = jnp.pad(b3, ((0, 0), (0, D_out_p - D_out)))

    # ---- batch tiling --------------------------------------------------------
    # Multiple of 16 (bf16 packs (16,128) per vreg); no larger than padded B.
    tile_b = max(16, _round_up(tile_b, 16))
    tile_b = min(tile_b, _round_up(B, 16))
    # Prefer >= 2 grid steps when the batch allows it (v7x has 2 TCs/chip).
    if B > 32:
        tile_b = min(tile_b, _round_up((B + 1) // 2, 16))
    B_p = _round_up(B, tile_b)

    # Keep x in its original dtype (no wrapper cast); only pad ragged batch.
    x_p = jnp.pad(x, ((0, B_p - B), (0, 0))) if B_p != B else x

    w1c, w2c, w3c = (w.astype(compute_dtype) for w in (w1, w2, w3))
    b1f, b2f, b3f = (b.astype(jnp.float32) for b in (b1, b2, b3))

    grid = (B_p // tile_b,)

    # Grid-invariant, never re-fetched -> single pipeline buffer.
    full = lambda shape: pl.BlockSpec(shape, lambda i: (0, 0),
                                      pipeline_mode=pl.Buffered(1))

    out_itemsize = jnp.dtype(out_dtype).itemsize
    w_bytes = sum(a.size * a.dtype.itemsize for a in (w1c, b1f, w2c, b2f, w3c, b3f))

    flops = 2 * B_p * (D_in * H1 + H1 * H2 + H2 * D_out_p)
    bytes_accessed = (
        x_p.size * x_p.dtype.itemsize      # x read (original dtype)
        + B_p * D_out_p * out_itemsize     # output write
        + w_bytes                          # weights/biases read once
    )

    # Explicit VMEM budget: double-buffered x / out tiles, single-buffered
    # weights, in-kernel f32 intermediates, plus headroom for Mosaic scratch.
    per_step_vmem = (
        2 * tile_b * D_in * x_p.dtype.itemsize
        + 2 * tile_b * D_out_p * out_itemsize
        + w_bytes
        + tile_b * (D_in * jnp.dtype(compute_dtype).itemsize
                    + (H1 + H2 + D_out_p) * 4)
    )
    vmem_limit = int(min(max(32 << 20, per_step_vmem + (8 << 20)), 64 << 20))

    out = pl.pallas_call(
        functools.partial(cosbert_kernel, compute_dtype=compute_dtype),
        out_shape=jax.ShapeDtypeStruct((B_p, D_out_p), out_dtype),
        grid_spec=pltpu.PrefetchScalarGridSpec(
            num_scalar_prefetch=0,
            grid=grid,
            in_specs=[
                pl.BlockSpec((tile_b, D_in), lambda i: (i, 0)),  # x tile
                full((D_in, H1)), full((1, H1)),
                full((H1, H2)), full((1, H2)),
                full((H2, D_out_p)), full((1, D_out_p)),
            ],
            out_specs=pl.BlockSpec((tile_b, D_out_p), lambda i: (i, 0)),
        ),
        compiler_params=pltpu.CompilerParams(
            dimension_semantics=("parallel",),
            vmem_limit_bytes=vmem_limit,
        ),
        cost_estimate=pl.CostEstimate(
            flops=flops, transcendentals=0, bytes_accessed=bytes_accessed),
    )(x_p, w1c, b1f, w2c, b2f, w3c, b3f)

    if return_padded:
        return out            # (B_p, 128); valid logits are [:B, :52]
    # Strip batch padding and the lane padding on the output features.
    return out[:B, :D_out]


def init_params(key, d_in=384, h1=256, h2=128, d_out=52, dtype=jnp.float32):
    """Deterministic init matching PyTorch nn.Linear default shapes/scales
    (uniform(-1/sqrt(fan_in), 1/sqrt(fan_in))). Weights stored as [in, out]."""
    ks = jax.random.split(key, 6)

    def lin(kw, kb, fan_in, fan_out):
        bound = 1.0 / (fan_in ** 0.5)
        w = jax.random.uniform(kw, (fan_in, fan_out), dtype, -bound, bound)
        b = jax.random.uniform(kb, (1, fan_out), dtype, -bound, bound)
        return w, b

    w1, b1 = lin(ks[0], ks[1], d_in, h1)
    w2, b2 = lin(ks[2], ks[3], h1, h2)
    w3, b3 = lin(ks[4], ks[5], h2, d_out)
    return {"w1": w1, "b1": b1, "w2": w2, "b2": b2, "w3": w3, "b3": b3}


def cosbert_ref(x, p):
    h1 = jnp.maximum(x @ p["w1"] + p["b1"], 0.0)
    h2 = jnp.maximum(h1 @ p["w2"] + p["b2"], 0.0)
    return h2 @ p["w3"] + p["b3"]


if __name__ == "__main__":
    key = jax.random.PRNGKey(0)
    k_x, k_x2, k_p = jax.random.split(key, 3)

    D_in = 384
    params = init_params(k_p, d_in=D_in)

    # Small batch (single grid step, padded 8 -> 16 rows).
    B = 8
    x = jax.random.normal(k_x, (B, D_in), jnp.float32)
    out = jax.block_until_ready(cosbert_forward(x, params))
    ref = cosbert_ref(x, params)  # full-f32 reference
    assert out.shape == (B, 52)
    # bf16 MXU inputs with f32 accumulation -> loose-but-safe tolerance vs f32 ref.
    assert jnp.allclose(out, ref, atol=5e-2, rtol=5e-2), "mismatch vs JAX reference (B=8)"

    # Ragged batch exercising the multi-step grid + batch padding path.
    B2 = 100
    x2 = jax.random.normal(k_x2, (B2, D_in), jnp.float32)
    out2 = jax.block_until_ready(cosbert_forward(x2, params))
    ref2 = cosbert_ref(x2, params)
    assert out2.shape == (B2, 52)
    assert jnp.allclose(out2, ref2, atol=5e-2, rtol=5e-2), "mismatch vs JAX reference (B=100)"

    print("KERNEL_OK")
</pallas_src>

<mosaic_0001>
module attributes {stable_mosaic.version = 11 : i64} {
  func.func @cosbert_kernel(%arg0: i32, %arg1: memref<16x384xf32, #tpu.memory_space<vmem>>, %arg2: memref<384x256xbf16, #tpu.memory_space<vmem>>, %arg3: memref<1x256xf32, #tpu.memory_space<vmem>>, %arg4: memref<256x128xbf16, #tpu.memory_space<vmem>>, %arg5: memref<1x128xf32, #tpu.memory_space<vmem>>, %arg6: memref<128x128xbf16, #tpu.memory_space<vmem>>, %arg7: memref<1x128xf32, #tpu.memory_space<vmem>>, %arg8: memref<16x128xf32, #tpu.memory_space<vmem>>) attributes {dimension_semantics = [#tpu.dimension_semantics<parallel>], iteration_bounds = array<i64: 1>, scalar_prefetch = 0 : i64, scratch_operands = 0 : i64, tpu.core_type = #tpu.core_type<tc>, window_params = [{transform_indices = @transform_0, window_bounds = array<i64: 16, 384>}, {pipeline_mode = #tpu.pipeline_mode<synchronous>, transform_indices = @transform_1, window_bounds = array<i64: 384, 256>}, {pipeline_mode = #tpu.pipeline_mode<synchronous>, transform_indices = @transform_2, window_bounds = array<i64: 1, 256>}, {pipeline_mode = #tpu.pipeline_mode<synchronous>, transform_indices = @transform_3, window_bounds = array<i64: 256, 128>}, {pipeline_mode = #tpu.pipeline_mode<synchronous>, transform_indices = @transform_4, window_bounds = array<i64: 1, 128>}, {pipeline_mode = #tpu.pipeline_mode<synchronous>, transform_indices = @transform_5, window_bounds = array<i64: 128, 128>}, {pipeline_mode = #tpu.pipeline_mode<synchronous>, transform_indices = @transform_6, window_bounds = array<i64: 1, 128>}, {transform_indices = @transform_7, window_bounds = array<i64: 16, 128>}]} {
    %c0 = arith.constant 0 : index
    %c0_0 = arith.constant 0 : index
    %0 = vector.load %arg1[%c0, %c0_0] : memref<16x384xf32, #tpu.memory_space<vmem>>, vector<16x384xf32>
    %1 = arith.truncf %0 : vector<16x384xf32> to vector<16x384xbf16>
    %c0_1 = arith.constant 0 : index
    %c0_2 = arith.constant 0 : index
    %2 = vector.load %arg2[%c0_1, %c0_2] : memref<384x256xbf16, #tpu.memory_space<vmem>>, vector<384x256xbf16>
    %cst = arith.constant dense<0.000000e+00> : vector<16x256xf32>
    %3 = tpu.matmul %1, %2, %cst {dimension_numbers = #tpu.dot_dimension_numbers<[1], [0], [0], [1], [0, 0, 1, 1], [], []>} : vector<16x384xbf16>, vector<384x256xbf16>, vector<16x256xf32> -> vector<16x256xf32>
    %c0_3 = arith.constant 0 : index
    %c0_4 = arith.constant 0 : index
    %4 = vector.load %arg3[%c0_3, %c0_4] : memref<1x256xf32, #tpu.memory_space<vmem>>, vector<1x256xf32>
    %5 = vector.broadcast %4 : vector<1x256xf32> to vector<16x256xf32>
    %6 = arith.addf %3, %5 : vector<16x256xf32>
    %cst_5 = arith.constant 0.000000e+00 : f32
    %7 = vector.broadcast %cst_5 : f32 to vector<16x256xf32>
    %8 = arith.maximumf %6, %7 : vector<16x256xf32>
    %9 = arith.truncf %8 : vector<16x256xf32> to vector<16x256xbf16>
    %c0_6 = arith.constant 0 : index
    %c0_7 = arith.constant 0 : index
    %10 = vector.load %arg4[%c0_6, %c0_7] : memref<256x128xbf16, #tpu.memory_space<vmem>>, vector<256x128xbf16>
    %cst_8 = arith.constant dense<0.000000e+00> : vector<16x128xf32>
    %11 = tpu.matmul %9, %10, %cst_8 {dimension_numbers = #tpu.dot_dimension_numbers<[1], [0], [0], [1], [0, 0, 1, 1], [], []>} : vector<16x256xbf16>, vector<256x128xbf16>, vector<16x128xf32> -> vector<16x128xf32>
    %c0_9 = arith.constant 0 : index
    %c0_10 = arith.constant 0 : index
    %12 = vector.load %arg5[%c0_9, %c0_10] : memref<1x128xf32, #tpu.memory_space<vmem>>, vector<1x128xf32>
    %13 = vector.broadcast %12 : vector<1x128xf32> to vector<16x128xf32>
    %14 = arith.addf %11, %13 : vector<16x128xf32>
    %cst_11 = arith.constant 0.000000e+00 : f32
    %15 = vector.broadcast %cst_11 : f32 to vector<16x128xf32>
    %16 = arith.maximumf %14, %15 : vector<16x128xf32>
    %17 = arith.truncf %16 : vector<16x128xf32> to vector<16x128xbf16>
    %c0_12 = arith.constant 0 : index
    %c0_13 = arith.constant 0 : index
    %18 = vector.load %arg6[%c0_12, %c0_13] : memref<128x128xbf16, #tpu.memory_space<vmem>>, vector<128x128xbf16>
    %cst_14 = arith.constant dense<0.000000e+00> : vector<16x128xf32>
    %19 = tpu.matmul %17, %18, %cst_14 {dimension_numbers = #tpu.dot_dimension_numbers<[1], [0], [0], [1], [0, 0, 1, 1], [], []>} : vector<16x128xbf16>, vector<128x128xbf16>, vector<16x128xf32> -> vector<16x128xf32>
    %c0_15 = arith.constant 0 : index
    %c0_16 = arith.constant 0 : index
    %20 = vector.load %arg7[%c0_15, %c0_16] : memref<1x128xf32, #tpu.memory_space<vmem>>, vector<1x128xf32>
    %21 = vector.broadcast %20 : vector<1x128xf32> to vector<16x128xf32>
    %22 = arith.addf %19, %21 : vector<16x128xf32>
    %c0_17 = arith.constant 0 : index
    %c0_18 = arith.constant 0 : index
    %23 = vector.load %arg8[%c0_17, %c0_18] : memref<16x128xf32, #tpu.memory_space<vmem>>, vector<16x128xf32>
    tpu.vector_store %arg8[%c0_17, %c0_18], %22 {strides = array<i32>} : memref<16x128xf32, #tpu.memory_space<vmem>>, vector<16x128xf32>,
    return
  }
  func.func @transform_0(%arg0: i32) -> (i32, i32) {
    %c0_i32 = arith.constant 0 : i32
    %c0_i32_0 = arith.constant 0 : i32
    return %arg0, %c0_i32 : i32, i32
  }
  func.func @transform_1(%arg0: i32) -> (i32, i32) {
    %c0_i32 = arith.constant 0 : i32
    %c0_i32_0 = arith.constant 0 : i32
    %c0_i32_1 = arith.constant 0 : i32
    return %c0_i32, %c0_i32_0 : i32, i32
  }
  func.func @transform_2(%arg0: i32) -> (i32, i32) {
    %c0_i32 = arith.constant 0 : i32
    %c0_i32_0 = arith.constant 0 : i32
    %c0_i32_1 = arith.constant 0 : i32
    return %c0_i32, %c0_i32_0 : i32, i32
  }
  func.func @transform_3(%arg0: i32) -> (i32, i32) {
    %c0_i32 = arith.constant 0 : i32
    %c0_i32_0 = arith.constant 0 : i32
    %c0_i32_1 = arith.constant 0 : i32
    return %c0_i32, %c0_i32_0 : i32, i32
  }
  func.func @transform_4(%arg0: i32) -> (i32, i32) {
    %c0_i32 = arith.constant 0 : i32
    %c0_i32_0 = arith.constant 0 : i32
    %c0_i32_1 = arith.constant 0 : i32
    return %c0_i32, %c0_i32_0 : i32, i32
  }
  func.func @transform_5(%arg0: i32) -> (i32, i32) {
    %c0_i32 = arith.constant 0 : i32
    %c0_i32_0 = arith.constant 0 : i32
    %c0_i32_1 = arith.constant 0 : i32
    return %c0_i32, %c0_i32_0 : i32, i32
  }
  func.func @transform_6(%arg0: i32) -> (i32, i32) {
    %c0_i32 = arith.constant 0 : i32
    %c0_i32_0 = arith.constant 0 : i32
    %c0_i32_1 = arith.constant 0 : i32
    return %c0_i32, %c0_i32_0 : i32, i32
  }
  func.func @transform_7(%arg0: i32) -> (i32, i32) {
    %c0_i32 = arith.constant 0 : i32
    %c0_i32_0 = arith.constant 0 : i32
    return %arg0, %c0_i32 : i32, i32
  }
}

</mosaic_0001>

<llo_original>
// kernel: tpu_custom_call.1
$region0: #{tpu_custom_call.1}
  #allocation0 [shape = 'u32[]', space=smem, size = 0x4, offset = 0x4, fixed_abs, tag = 'smem constant byte address 0x4 - core index']
  #allocation1 [shape = 'u32[72,128]{1,0:T(1,128)}', space=vmem, size = 0x9000, scoped, tag = 'internal scratch']
  %s0 = inlined_call_operand.hbm [shape: f32[16,384], index: 0, kind: input, shape index: {}]
  %s1 = inlined_call_operand.hbm [shape: bf16[384,256], index: 1, kind: input, shape index: {}]
  %s2 = inlined_call_operand.hbm [shape: f32[1,256], index: 2, kind: input, shape index: {}]
  %s3 = inlined_call_operand.hbm [shape: bf16[256,128], index: 3, kind: input, shape index: {}]
  %s4 = inlined_call_operand.vmem [shape: f32[1,128], index: 4, kind: input, shape index: {}]
  %s5 = inlined_call_operand.hbm [shape: bf16[128,128], index: 5, kind: input, shape index: {}]
  %s6 = inlined_call_operand.vmem [shape: f32[1,128], index: 6, kind: input, shape index: {}]
  %s7 = inlined_call_operand.hbm [shape: f32[16,128], index: 7, kind: output, shape index: {}]
  %s8 = sld [smem:[#allocation0]]
  $region58: #{tpu_custom_call.1} parent=0
    _
  %s10 = ssub.s32 1, %s8
  %s11 = scalar_select 0, %s10, %s8
  $region1: #{tpu_custom_call.1} parent=0
    #allocation2 [shape = 'u8[24576]{0}', space=vmem, size = 0x6000, scoped, tag = 'input window, operand 0, single buffered']
    #allocation3 [shape = 's32[1]{0}', space=sflag, size = 0x4, scoped, tag = 'scoped memory for tpu_custom_call.1']
    #allocation4 [shape = 's32[1]{0}', space=sflag, size = 0x4, scoped, tag = 'scoped memory for tpu_custom_call.1']
    #allocation5 [shape = 'u8[196608]{0}', space=vmem, size = 0x30000, scoped, tag = 'input window, operand 1, single buffered']
    #allocation6 [shape = 's32[1]{0}', space=sflag, size = 0x4, scoped, tag = 'scoped memory for tpu_custom_call.1']
    #allocation7 [shape = 'u8[1024]{0}', space=vmem, size = 0x400, scoped, tag = 'input window, operand 2, single buffered']
    #allocation8 [shape = 'u8[65536]{0}', space=vmem, size = 0x10000, scoped, tag = 'input window, operand 3, single buffered']
    #allocation9 [shape = 's32[1]{0}', space=sflag, size = 0x4, scoped, tag = 'scoped memory for tpu_custom_call.1']
    #allocation10 [shape = 'u8[32768]{0}', space=vmem, size = 0x8000, scoped, tag = 'input window, operand 5, single buffered']
    #allocation11 [shape = 'u8[8192]{0}', space=vmem, size = 0x2000, scoped, tag = 'output window, operand 0, single buffered']
    %12 = vsyncpa [#allocation3], 0
    %13 = vsyncpa [#allocation6], 0
    %14 = vsyncpa [#allocation9], 0
    %15 = vsyncpa [#allocation4], 0
    // Predicated region
    $region2: #{tpu_custom_call.1} parent=1 // pred_check
      _
    $region3: #{tpu_custom_call.1} parent=1 // pred_check_branch
      %17 = sbr.rel (0) target = $region5
    $region4: #{tpu_custom_call.1} parent=1 // pred_region
      %19 = vsyncadd [#allocation3], 0
      %s20 = sshll.u32 %s0, 4
      %s21 = int_to_ptr.hbm [resolvable:$true] %s20
      %s22 = sshll.u32 [#allocation2], 4
      %s23 = int_to_ptr.vmem [resolvable:$true] %s22
      %28 = dma.hbm_to_vmem [thread:$0]  %s21, 768, %s23, [#allocation3], 384, 384, 24
    $region5: #{tpu_custom_call.1} parent=1 // pred_fallthru
      _
    // Predicated region
    $region6: #{tpu_custom_call.1} parent=1 // pred_check
      _
    $region7: #{tpu_custom_call.1} parent=1 // pred_check_branch
      %30 = sbr.rel (0) target = $region9
    $region8: #{tpu_custom_call.1} parent=1 // pred_region
      %32 = vsyncadd [#allocation6], 0
      %s33 = sshll.u32 %s1, 4
      %s34 = int_to_ptr.hbm [resolvable:$true] %s33
      %s35 = sshll.u32 [#allocation5], 4
      %s36 = int_to_ptr.vmem [resolvable:$true] %s35
      %41 = dma.hbm_to_vmem [thread:$0]  %s34, 6144, %s36, [#allocation6], 128, 128, 8
    $region9: #{tpu_custom_call.1} parent=1 // pred_fallthru
      _
    // Predicated region
    $region10: #{tpu_custom_call.1} parent=1 // pred_check
      _
    $region11: #{tpu_custom_call.1} parent=1 // pred_check_branch
      %43 = sbr.rel (0) target = $region13
    $region12: #{tpu_custom_call.1} parent=1 // pred_region
      %45 = vsyncadd [#allocation6], 0
      %s47 = sshll.u32 %s2, 4
      %s48 = int_to_ptr.hbm [resolvable:$true] %s47
      %s49 = sshll.u32 [#allocation7], 4
      %s50 = int_to_ptr.vmem [resolvable:$true] %s49
      %52 = dma.hbm_to_vmem [thread:$0]  %s48, 32, %s50, [#allocation6]
    $region13: #{tpu_custom_call.1} parent=1 // pred_fallthru
      _
    // Predicated region
    $region14: #{tpu_custom_call.1} parent=1 // pred_check
      _
    $region15: #{tpu_custom_call.1} parent=1 // pred_check_branch
      %54 = sbr.rel (0) target = $region17
    $region16: #{tpu_custom_call.1} parent=1 // pred_region
      %56 = vsyncadd [#allocation9], 0
      %s57 = sshll.u32 %s3, 4
      %s58 = int_to_ptr.hbm [resolvable:$true] %s57
      %s59 = sshll.u32 [#allocation8], 4
      %s60 = int_to_ptr.vmem [resolvable:$true] %s59
      %65 = dma.hbm_to_vmem [thread:$0]  %s58, 2048, %s60, [#allocation9], 64, 64, 4
    $region17: #{tpu_custom_call.1} parent=1 // pred_fallthru
      _
    // Predicated region
    $region18: #{tpu_custom_call.1} parent=1 // pred_check
      _
    $region19: #{tpu_custom_call.1} parent=1 // pred_check_branch
      %67 = sbr.rel (0) target = $region21
    $region20: #{tpu_custom_call.1} parent=1 // pred_region
      _
    $region21: #{tpu_custom_call.1} parent=1 // pred_fallthru
      _
    // Predicated region
    $region22: #{tpu_custom_call.1} parent=1 // pred_check
      _
    $region23: #{tpu_custom_call.1} parent=1 // pred_check_branch
      %69 = sbr.rel (0) target = $region25
    $region24: #{tpu_custom_call.1} parent=1 // pred_region
      %71 = vsyncadd [#allocation9], 0
      %s72 = sshll.u32 %s5, 4
      %s73 = int_to_ptr.hbm [resolvable:$true] %s72
      %s74 = sshll.u32 [#allocation10], 4
      %s75 = int_to_ptr.vmem [resolvable:$true] %s74
      %80 = dma.hbm_to_vmem [thread:$0]  %s73, 1024, %s75, [#allocation9], 64, 64, 4
    $region25: #{tpu_custom_call.1} parent=1 // pred_fallthru
      _
    // Predicated region
    $region26: #{tpu_custom_call.1} parent=1 // pred_check
      _
    $region27: #{tpu_custom_call.1} parent=1 // pred_check_branch
      %82 = sbr.rel (0) target = $region29
    $region28: #{tpu_custom_call.1} parent=1 // pred_region
      _
    $region29: #{tpu_custom_call.1} parent=1 // pred_fallthru
      _
    // Predicated region
    $region30: #{tpu_custom_call.1} parent=1 // pred_check
      _
    $region31: #{tpu_custom_call.1} parent=1 // pred_check_branch
      %84 = sbr.rel (0) target = $region33
    $region32: #{tpu_custom_call.1} parent=1 // pred_region
      %86 = dma.done [#allocation3], 768
    $region33: #{tpu_custom_call.1} parent=1 // pred_fallthru
      _
    // Predicated region
    $region34: #{tpu_custom_call.1} parent=1 // pred_check
      _
    $region35: #{tpu_custom_call.1} parent=1 // pred_check_branch
      %88 = sbr.rel (0) target = $region37
    $region36: #{tpu_custom_call.1} parent=1 // pred_region
      %90 = dma.done [#allocation6], 6144
    $region37: #{tpu_custom_call.1} parent=1 // pred_fallthru
      _
    // Predicated region
    $region38: #{tpu_custom_call.1} parent=1 // pred_check
      _
    $region39: #{tpu_custom_call.1} parent=1 // pred_check_branch
      %92 = sbr.rel (0) target = $region41
    $region40: #{tpu_custom_call.1} parent=1 // pred_region
      %94 = dma.done [#allocation6], 32
    $region41: #{tpu_custom_call.1} parent=1 // pred_fallthru
      _
    // Predicated region
    $region42: #{tpu_custom_call.1} parent=1 // pred_check
      _
    $region43: #{tpu_custom_call.1} parent=1 // pred_check_branch
      %96 = sbr.rel (0) target = $region45
    $region44: #{tpu_custom_call.1} parent=1 // pred_region
      %98 = dma.done [#allocation9], 2048
    $region45: #{tpu_custom_call.1} parent=1 // pred_fallthru
      _
    // Predicated region
    $region46: #{tpu_custom_call.1} parent=1 // pred_check
      _
    $region47: #{tpu_custom_call.1} parent=1 // pred_check_branch
      %100 = sbr.rel (0) target = $region49
    $region48: #{tpu_custom_call.1} parent=1 // pred_region
      %102 = dma.done [#allocation9], 1024
    $region49: #{tpu_custom_call.1} parent=1 // pred_fallthru
      _
    %v103 = vld [vmem:[#allocation2] sm:$0xff]
    %v104 = vld [vmem:[#allocation2 + $0x8] sm:$0xff]
    %v105 = vld [vmem:[#allocation2 + $0x10] sm:$0xff]
    %v106 = vld [vmem:[#allocation2 + $0x18] sm:$0xff]
    %v107 = vld [vmem:[#allocation2 + $0x20] sm:$0xff]
    %v108 = vld [vmem:[#allocation2 + $0x28] sm:$0xff]
    %v109 = vpack.c.bf16 %v106, %v103
    %v110 = vpack.c.bf16 %v107, %v104
    %v111 = vpack.c.bf16 %v108, %v105
    %v112 = vld [vmem:[#allocation5] sm:$0xff]
    %v113 = vld [vmem:[#allocation5 + $0x8] sm:$0xff]
    %v114 = vld [vmem:[#allocation5 + $0x10] sm:$0xff]
    %v115 = vld [vmem:[#allocation5 + $0x18] sm:$0xff]
    %v116 = vld [vmem:[#allocation5 + $0x20] sm:$0xff]
    %v117 = vld [vmem:[#allocation5 + $0x28] sm:$0xff]
    %v118 = vld [vmem:[#allocation5 + $0x30] sm:$0xff]
    %v119 = vld [vmem:[#allocation5 + $0x38] sm:$0xff]
    %v120 = vld [vmem:[#allocation5 + $0x40] sm:$0xff]
    %v121 = vld [vmem:[#allocation5 + $0x48] sm:$0xff]
    %v122 = vld [vmem:[#allocation5 + $0x50] sm:$0xff]
    %v123 = vld [vmem:[#allocation5 + $0x58] sm:$0xff]
    %v124 = vld [vmem:[#allocation5 + $0x60] sm:$0xff]
    %v125 = vld [vmem:[#allocation5 + $0x68] sm:$0xff]
    %v126 = vld [vmem:[#allocation5 + $0x70] sm:$0xff]
    %v127 = vld [vmem:[#allocation5 + $0x78] sm:$0xff]
    %v128 = vld [vmem:[#allocation5 + $0x80] sm:$0xff]
    %v129 = vld [vmem:[#allocation5 + $0x88] sm:$0xff]
    %v130 = vld [vmem:[#allocation5 + $0x90] sm:$0xff]
    %v131 = vld [vmem:[#allocation5 + $0x98] sm:$0xff]
    %v132 = vld [vmem:[#allocation5 + $0xa0] sm:$0xff]
    %v133 = vld [vmem:[#allocation5 + $0xa8] sm:$0xff]
    %v134 = vld [vmem:[#allocation5 + $0xb0] sm:$0xff]
    %v135 = vld [vmem:[#allocation5 + $0xb8] sm:$0xff]
    %v136 = vld [vmem:[#allocation5 + $0xc0] sm:$0xff]
    %v137 = vld [vmem:[#allocation5 + $0xc8] sm:$0xff]
    %v138 = vld [vmem:[#allocation5 + $0xd0] sm:$0xff]
    %v139 = vld [vmem:[#allocation5 + $0xd8] sm:$0xff]
    %v140 = vld [vmem:[#allocation5 + $0xe0] sm:$0xff]
    %v141 = vld [vmem:[#allocation5 + $0xe8] sm:$0xff]
    %v142 = vld [vmem:[#allocation5 + $0xf0] sm:$0xff]
    %v143 = vld [vmem:[#allocation5 + $0xf8] sm:$0xff]
    %v144 = vld [vmem:[#allocation5 + $0x100] sm:$0xff]
    %v145 = vld [vmem:[#allocation5 + $0x108] sm:$0xff]
    %v146 = vld [vmem:[#allocation5 + $0x110] sm:$0xff]
    %v147 = vld [vmem:[#allocation5 + $0x118] sm:$0xff]
    %v148 = vld [vmem:[#allocation5 + $0x120] sm:$0xff]
    %v149 = vld [vmem:[#allocation5 + $0x128] sm:$0xff]
    %v150 = vld [vmem:[#allocation5 + $0x130] sm:$0xff]
    %v151 = vld [vmem:[#allocation5 + $0x138] sm:$0xff]
    %v152 = vld [vmem:[#allocation5 + $0x140] sm:$0xff]
    %v153 = vld [vmem:[#allocation5 + $0x148] sm:$0xff]
    %v154 = vld [vmem:[#allocation5 + $0x150] sm:$0xff]
    %v155 = vld [vmem:[#allocation5 + $0x158] sm:$0xff]
    %v156 = vld [vmem:[#allocation5 + $0x160] sm:$0xff]
    %v157 = vld [vmem:[#allocation5 + $0x168] sm:$0xff]
    %v158 = vld [vmem:[#allocation5 + $0x170] sm:$0xff]
    %v159 = vld [vmem:[#allocation5 + $0x178] sm:$0xff]
    %v160 = vld [vmem:[#allocation7] sm:$0x3]
    %v162 = vperm.slane %v160, 0
    %v163 = vperm.slane %v160, 1
    %v214 = vunpack.c.l.b16 %v112
    %v215 = vunpack.c.h.b16 %v112
    %v216 = vunpack.c.l.b16 %v113
    %v217 = vunpack.c.h.b16 %v113
    %v218 = vunpack.c.l.b16 %v114
    %v219 = vunpack.c.h.b16 %v114
    %v220 = vunpack.c.l.b16 %v115
    %v221 = vunpack.c.h.b16 %v115
    %v222 = vunpack.c.l.b16 %v116
    %v223 = vunpack.c.h.b16 %v116
    %v224 = vunpack.c.l.b16 %v117
    %v225 = vunpack.c.h.b16 %v117
    %v226 = vunpack.c.l.b16 %v118
    %v227 = vunpack.c.h.b16 %v118
    %v228 = vunpack.c.l.b16 %v119
    %v229 = vunpack.c.h.b16 %v119
    %v230 = vunpack.c.l.b16 %v120
    %v231 = vunpack.c.h.b16 %v120
    %v232 = vunpack.c.l.b16 %v121
    %v233 = vunpack.c.h.b16 %v121
    %v234 = vunpack.c.l.b16 %v122
    %v235 = vunpack.c.h.b16 %v122
    %v236 = vunpack.c.l.b16 %v123
    %v237 = vunpack.c.h.b16 %v123
    %v238 = vunpack.c.l.b16 %v124
    %v239 = vunpack.c.h.b16 %v124
    %v240 = vunpack.c.l.b16 %v125
    %v241 = vunpack.c.h.b16 %v125
    %v242 = vunpack.c.l.b16 %v126
    %v243 = vunpack.c.h.b16 %v126
    %v244 = vunpack.c.l.b16 %v127
    %v245 = vunpack.c.h.b16 %v127
    %v246 = vunpack.c.l.b16 %v128
    %v247 = vunpack.c.h.b16 %v128
    %v248 = vunpack.c.l.b16 %v129
    %v249 = vunpack.c.h.b16 %v129
    %v250 = vunpack.c.l.b16 %v130
    %v251 = vunpack.c.h.b16 %v130
    %v252 = vunpack.c.l.b16 %v131
    %v253 = vunpack.c.h.b16 %v131
    %v254 = vunpack.c.l.b16 %v132
    %v255 = vunpack.c.h.b16 %v132
    %v256 = vunpack.c.l.b16 %v133
    %v257 = vunpack.c.h.b16 %v133
    %v258 = vunpack.c.l.b16 %v134
    %v259 = vunpack.c.h.b16 %v134
    %v260 = vunpack.c.l.b16 %v135
    %v261 = vunpack.c.h.b16 %v135
    %v262 = vunpack.c.l.b16 %v136
    %v263 = vunpack.c.h.b16 %v136
    %v264 = vunpack.c.l.b16 %v137
    %v265 = vunpack.c.h.b16 %v137
    %v266 = vunpack.c.l.b16 %v138
    %v267 = vunpack.c.h.b16 %v138
    %v268 = vunpack.c.l.b16 %v139
    %v269 = vunpack.c.h.b16 %v139
    %v270 = vunpack.c.l.b16 %v140
    %v271 = vunpack.c.h.b16 %v140
    %v272 = vunpack.c.l.b16 %v141
    %v273 = vunpack.c.h.b16 %v141
    %v274 = vunpack.c.l.b16 %v142
    %v275 = vunpack.c.h.b16 %v142
    %v276 = vunpack.c.l.b16 %v143
    %v277 = vunpack.c.h.b16 %v143
    %v278 = vunpack.c.l.b16 %v144
    %v279 = vunpack.c.h.b16 %v144
    %v280 = vunpack.c.l.b16 %v145
    %v281 = vunpack.c.h.b16 %v145
    %v282 = vunpack.c.l.b16 %v146
    %v283 = vunpack.c.h.b16 %v146
    %v284 = vunpack.c.l.b16 %v147
    %v285 = vunpack.c.h.b16 %v147
    %v286 = vunpack.c.l.b16 %v148
    %v287 = vunpack.c.h.b16 %v148
    %v288 = vunpack.c.l.b16 %v149
    %v289 = vunpack.c.h.b16 %v149
    %v290 = vunpack.c.l.b16 %v150
    %v291 = vunpack.c.h.b16 %v150
    %v292 = vunpack.c.l.b16 %v151
    %v293 = vunpack.c.h.b16 %v151
    %v294 = vunpack.c.l.b16 %v152
    %v295 = vunpack.c.h.b16 %v152
    %v296 = vunpack.c.l.b16 %v153
    %v297 = vunpack.c.h.b16 %v153
    %v298 = vunpack.c.l.b16 %v154
    %v299 = vunpack.c.h.b16 %v154
    %v300 = vunpack.c.l.b16 %v155
    %v301 = vunpack.c.h.b16 %v155
    %v302 = vunpack.c.l.b16 %v156
    %v303 = vunpack.c.h.b16 %v156
    %v304 = vunpack.c.l.b16 %v157
    %v305 = vunpack.c.h.b16 %v157
    %v306 = vunpack.c.l.b16 %v158
    %v307 = vunpack.c.h.b16 %v158
    %v308 = vunpack.c.l.b16 %v159
    %v309 = vunpack.c.h.b16 %v159
    %v310 = vpack.c.b16 %v216, %v214
    %v311 = vpack.c.b16 %v217, %v215
    %v312 = vpack.c.b16 %v220, %v218
    %v313 = vpack.c.b16 %v221, %v219
    %v314 = vpack.c.b16 %v224, %v222
    %v315 = vpack.c.b16 %v225, %v223
    %v316 = vpack.c.b16 %v228, %v226
    %v317 = vpack.c.b16 %v229, %v227
    %v318 = vpack.c.b16 %v232, %v230
    %v319 = vpack.c.b16 %v233, %v231
    %v320 = vpack.c.b16 %v236, %v234
    %v321 = vpack.c.b16 %v237, %v235
    %v322 = vpack.c.b16 %v240, %v238
    %v323 = vpack.c.b16 %v241, %v239
    %v324 = vpack.c.b16 %v244, %v242
    %v325 = vpack.c.b16 %v245, %v243
    %v326 = vpack.c.b16 %v248, %v246
    %v327 = vpack.c.b16 %v249, %v247
    %v328 = vpack.c.b16 %v252, %v250
    %v329 = vpack.c.b16 %v253, %v251
    %v330 = vpack.c.b16 %v256, %v254
    %v331 = vpack.c.b16 %v257, %v255
    %v332 = vpack.c.b16 %v260, %v258
    %v333 = vpack.c.b16 %v261, %v259
    %v334 = vpack.c.b16 %v264, %v262
    %v335 = vpack.c.b16 %v265, %v263
    %v336 = vpack.c.b16 %v268, %v266
    %v337 = vpack.c.b16 %v269, %v267
    %v338 = vpack.c.b16 %v272, %v270
    %v339 = vpack.c.b16 %v273, %v271
    %v340 = vpack.c.b16 %v276, %v274
    %v341 = vpack.c.b16 %v277, %v275
    %v342 = vpack.c.b16 %v280, %v278
    %v343 = vpack.c.b16 %v281, %v279
    %v344 = vpack.c.b16 %v284, %v282
    %v345 = vpack.c.b16 %v285, %v283
    %v346 = vpack.c.b16 %v288, %v286
    %v347 = vpack.c.b16 %v289, %v287
    %v348 = vpack.c.b16 %v292, %v290
    %v349 = vpack.c.b16 %v293, %v291
    %v350 = vpack.c.b16 %v296, %v294
    %v351 = vpack.c.b16 %v297, %v295
    %v352 = vpack.c.b16 %v300, %v298
    %v353 = vpack.c.b16 %v301, %v299
    %v354 = vpack.c.b16 %v304, %v302
    %v355 = vpack.c.b16 %v305, %v303
    %v356 = vpack.c.b16 %v308, %v306
    %v357 = vpack.c.b16 %v309, %v307
    %406 = vmatpush.bf16.msra.mxu0 %v324
    %407 = vmatpush.bf16.msra.mxu0 %v322
    %408 = vmatpush.bf16.msra.mxu0 %v320
    %409 = vmatpush.bf16.msra.mxu0 %v318
    %410 = vmatpush.bf16.msra.mxu0 %v316
    %411 = vmatpush.bf16.msra.mxu0 %v314
    %412 = vmatpush.bf16.msra.mxu0 %v312
    %413 = vmatpush.bf16.msra.mxu0 %v310
    %414 = vmatmul.bf16.gmra.mxu0 %v109
    %v415 = vpop.f32.mrf.mxu0
    %v416 = vadd.f32 %v162, %v415
    %v417 = vpop.f32.mrf.mxu0
    %v418 = vadd.f32 %v162, %v417
    %419 = vdwg.mxu0
    %420 = vmatpush.bf16.msra.mxu0 %v340
    %421 = vmatpush.bf16.msra.mxu0 %v338
    %422 = vmatpush.bf16.msra.mxu0 %v336
    %423 = vmatpush.bf16.msra.mxu0 %v334
    %424 = vmatpush.bf16.msra.mxu0 %v332
    %425 = vmatpush.bf16.msra.mxu0 %v330
    %426 = vmatpush.bf16.msra.mxu0 %v328
    %427 = vmatpush.bf16.msra.mxu0 %v326
    %428 = vmatmul.bf16.gmra.mxu0 %v110
    %v429 = vpop.f32.mrf.mxu0
    %v430 = vadd.f32 %v416, %v429
    %v431 = vpop.f32.mrf.mxu0
    %v432 = vadd.f32 %v418, %v431
    %433 = vdwg.mxu0
    %434 = vmatpush.bf16.msra.mxu0 %v356
    %435 = vmatpush.bf16.msra.mxu0 %v354
    %436 = vmatpush.bf16.msra.mxu0 %v352
    %437 = vmatpush.bf16.msra.mxu0 %v350
    %438 = vmatpush.bf16.msra.mxu0 %v348
    %439 = vmatpush.bf16.msra.mxu0 %v346
    %440 = vmatpush.bf16.msra.mxu0 %v344
    %441 = vmatpush.bf16.msra.mxu0 %v342
    %442 = vmatmul.bf16.gmra.mxu0 %v111
    %v443 = vpop.f32.mrf.mxu0
    %v444 = vadd.f32 %v430, %v443
    %v445 = vpop.f32.mrf.mxu0
    %v446 = vadd.f32 %v432, %v445
    %447 = vdwg.mxu0
    %448 = vmatpush.bf16.msra.mxu0 %v325
    %449 = vmatpush.bf16.msra.mxu0 %v323
    %450 = vmatpush.bf16.msra.mxu0 %v321
    %451 = vmatpush.bf16.msra.mxu0 %v319
    %452 = vmatpush.bf16.msra.mxu0 %v317
    %453 = vmatpush.bf16.msra.mxu0 %v315
    %454 = vmatpush.bf16.msra.mxu0 %v313
    %455 = vmatpush.bf16.msra.mxu0 %v311
    %456 = vmatmul.bf16.gmra.mxu0 %v109
    %v457 = vpop.f32.mrf.mxu0
    %v458 = vadd.f32 %v163, %v457
    %v459 = vpop.f32.mrf.mxu0
    %v460 = vadd.f32 %v163, %v459
    %461 = vdwg.mxu0
    %462 = vmatpush.bf16.msra.mxu0 %v341
    %463 = vmatpush.bf16.msra.mxu0 %v339
    %464 = vmatpush.bf16.msra.mxu0 %v337
    %465 = vmatpush.bf16.msra.mxu0 %v335
    %466 = vmatpush.bf16.msra.mxu0 %v333
    %467 = vmatpush.bf16.msra.mxu0 %v331
    %468 = vmatpush.bf16.msra.mxu0 %v329
    %469 = vmatpush.bf16.msra.mxu0 %v327
    %470 = vmatmul.bf16.gmra.mxu0 %v110
    %v471 = vpop.f32.mrf.mxu0
    %v472 = vadd.f32 %v458, %v471
    %v473 = vpop.f32.mrf.mxu0
    %v474 = vadd.f32 %v460, %v473
    %475 = vdwg.mxu0
    %476 = vmatpush.bf16.msra.mxu0 %v357
    %477 = vmatpush.bf16.msra.mxu0 %v355
    %478 = vmatpush.bf16.msra.mxu0 %v353
    %479 = vmatpush.bf16.msra.mxu0 %v351
    %480 = vmatpush.bf16.msra.mxu0 %v349
    %481 = vmatpush.bf16.msra.mxu0 %v347
    %482 = vmatpush.bf16.msra.mxu0 %v345
    %483 = vmatpush.bf16.msra.mxu0 %v343
    %484 = vmatmul.bf16.gmra.mxu0 %v111
    %v485 = vpop.f32.mrf.mxu0
    %v486 = vadd.f32 %v472, %v485
    %v487 = vpop.f32.mrf.mxu0
    %v488 = vadd.f32 %v474, %v487
    %489 = vdwg.mxu0
    %v490 = vmax.f32 %v444, 0.0
    %v491 = vmax.f32 %v486, 0.0
    %v492 = vmax.f32 %v446, 0.0
    %v493 = vmax.f32 %v488, 0.0
    %v494 = vpack.c.bf16 %v492, %v490
    %v495 = vpack.c.bf16 %v493, %v491
    %v496 = vld [vmem:[#allocation8] sm:$0xf]
    %v497 = vld [vmem:[#allocation8 + $0x4] sm:$0xf]
    %v498 = vld [vmem:[#allocation8 + $0x8] sm:$0xf]
    %v499 = vld [vmem:[#allocation8 + $0xc] sm:$0xf]
    %v500 = vld [vmem:[#allocation8 + $0x10] sm:$0xf]
    %v501 = vld [vmem:[#allocation8 + $0x14] sm:$0xf]
    %v502 = vld [vmem:[#allocation8 + $0x18] sm:$0xf]
    %v503 = vld [vmem:[#allocation8 + $0x1c] sm:$0xf]
    %v504 = vld [vmem:[#allocation8 + $0x20] sm:$0xf]
    %v505 = vld [vmem:[#allocation8 + $0x24] sm:$0xf]
    %v506 = vld [vmem:[#allocation8 + $0x28] sm:$0xf]
    %v507 = vld [vmem:[#allocation8 + $0x2c] sm:$0xf]
    %v508 = vld [vmem:[#allocation8 + $0x30] sm:$0xf]
    %v509 = vld [vmem:[#allocation8 + $0x34] sm:$0xf]
    %v510 = vld [vmem:[#allocation8 + $0x38] sm:$0xf]
    %v511 = vld [vmem:[#allocation8 + $0x3c] sm:$0xf]
    %v512 = vld [vmem:[#allocation8 + $0x40] sm:$0xf]
    %v513 = vld [vmem:[#allocation8 + $0x44] sm:$0xf]
    %v514 = vld [vmem:[#allocation8 + $0x48] sm:$0xf]
    %v515 = vld [vmem:[#allocation8 + $0x4c] sm:$0xf]
    %v516 = vld [vmem:[#allocation8 + $0x50] sm:$0xf]
    %v517 = vld [vmem:[#allocation8 + $0x54] sm:$0xf]
    %v518 = vld [vmem:[#allocation8 + $0x58] sm:$0xf]
    %v519 = vld [vmem:[#allocation8 + $0x5c] sm:$0xf]
    %v520 = vld [vmem:[#allocation8 + $0x60] sm:$0xf]
    %v521 = vld [vmem:[#allocation8 + $0x64] sm:$0xf]
    %v522 = vld [vmem:[#allocation8 + $0x68] sm:$0xf]
    %v523 = vld [vmem:[#allocation8 + $0x6c] sm:$0xf]
    %v524 = vld [vmem:[#allocation8 + $0x70] sm:$0xf]
    %v525 = vld [vmem:[#allocation8 + $0x74] sm:$0xf]
    %v526 = vld [vmem:[#allocation8 + $0x78] sm:$0xf]
    %v527 = vld [vmem:[#allocation8 + $0x7c] sm:$0xf]
    %v528 = vld [vmem:[%s4] sm:$0x1]
    %v530 = vperm.slane %v528, 0
    %v564 = vunpack.c.l.b16 %v496
    %v565 = vunpack.c.l.b16 %v497
    %v566 = vunpack.c.l.b16 %v498
    %v567 = vunpack.c.l.b16 %v499
    %v568 = vunpack.c.l.b16 %v500
    %v569 = vunpack.c.l.b16 %v501
    %v570 = vunpack.c.l.b16 %v502
    %v571 = vunpack.c.l.b16 %v503
    %v572 = vunpack.c.l.b16 %v504
    %v573 = vunpack.c.l.b16 %v505
    %v574 = vunpack.c.l.b16 %v506
    %v575 = vunpack.c.l.b16 %v507
    %v576 = vunpack.c.l.b16 %v508
    %v577 = vunpack.c.l.b16 %v509
    %v578 = vunpack.c.l.b16 %v510
    %v579 = vunpack.c.l.b16 %v511
    %v580 = vunpack.c.l.b16 %v512
    %v581 = vunpack.c.l.b16 %v513
    %v582 = vunpack.c.l.b16 %v514
    %v583 = vunpack.c.l.b16 %v515
    %v584 = vunpack.c.l.b16 %v516
    %v585 = vunpack.c.l.b16 %v517
    %v586 = vunpack.c.l.b16 %v518
    %v587 = vunpack.c.l.b16 %v519
    %v588 = vunpack.c.l.b16 %v520
    %v589 = vunpack.c.l.b16 %v521
    %v590 = vunpack.c.l.b16 %v522
    %v591 = vunpack.c.l.b16 %v523
    %v592 = vunpack.c.l.b16 %v524
    %v593 = vunpack.c.l.b16 %v525
    %v594 = vunpack.c.l.b16 %v526
    %v595 = vunpack.c.l.b16 %v527
    %v596 = vpack.c.b16 %v565, %v564
    %v597 = vpack.c.b16 %v567, %v566
    %v598 = vpack.c.b16 %v569, %v568
    %v599 = vpack.c.b16 %v571, %v570
    %v600 = vpack.c.b16 %v573, %v572
    %v601 = vpack.c.b16 %v575, %v574
    %v602 = vpack.c.b16 %v577, %v576
    %v603 = vpack.c.b16 %v579, %v578
    %v604 = vpack.c.b16 %v581, %v580
    %v605 = vpack.c.b16 %v583, %v582
    %v606 = vpack.c.b16 %v585, %v584
    %v607 = vpack.c.b16 %v587, %v586
    %v608 = vpack.c.b16 %v589, %v588
    %v609 = vpack.c.b16 %v591, %v590
    %v610 = vpack.c.b16 %v593, %v592
    %v611 = vpack.c.b16 %v595, %v594
    %628 = vmatpush.bf16.msra.mxu0 %v603
    %629 = vmatpush.bf16.msra.mxu0 %v602
    %630 = vmatpush.bf16.msra.mxu0 %v601
    %631 = vmatpush.bf16.msra.mxu0 %v600
    %632 = vmatpush.bf16.msra.mxu0 %v599
    %633 = vmatpush.bf16.msra.mxu0 %v598
    %634 = vmatpush.bf16.msra.mxu0 %v597
    %635 = vmatpush.bf16.msra.mxu0 %v596
    %636 = vmatmul.bf16.gmra.mxu0 %v494
    %v637 = vpop.f32.mrf.mxu0
    %v638 = vadd.f32 %v530, %v637
    %v639 = vpop.f32.mrf.mxu0
    %v640 = vadd.f32 %v530, %v639
    %641 = vdwg.mxu0
    %642 = vmatpush.bf16.msra.mxu0 %v611
    %643 = vmatpush.bf16.msra.mxu0 %v610
    %644 = vmatpush.bf16.msra.mxu0 %v609
    %645 = vmatpush.bf16.msra.mxu0 %v608
    %646 = vmatpush.bf16.msra.mxu0 %v607
    %647 = vmatpush.bf16.msra.mxu0 %v606
    %648 = vmatpush.bf16.msra.mxu0 %v605
    %649 = vmatpush.bf16.msra.mxu0 %v604
    %650 = vmatmul.bf16.gmra.mxu0 %v495
    %v651 = vpop.f32.mrf.mxu0
    %v652 = vadd.f32 %v638, %v651
    %v653 = vpop.f32.mrf.mxu0
    %v654 = vadd.f32 %v640, %v653
    %655 = vdwg.mxu0
    %v656 = vmax.f32 %v652, 0.0
    %v657 = vmax.f32 %v654, 0.0
    %v658 = vpack.c.bf16 %v657, %v656
    %v659 = vld [vmem:[#allocation10] sm:$0xf]
    %v660 = vld [vmem:[#allocation10 + $0x4] sm:$0xf]
    %v661 = vld [vmem:[#allocation10 + $0x8] sm:$0xf]
    %v662 = vld [vmem:[#allocation10 + $0xc] sm:$0xf]
    %v663 = vld [vmem:[#allocation10 + $0x10] sm:$0xf]
    %v664 = vld [vmem:[#allocation10 + $0x14] sm:$0xf]
    %v665 = vld [vmem:[#allocation10 + $0x18] sm:$0xf]
    %v666 = vld [vmem:[#allocation10 + $0x1c] sm:$0xf]
    %v667 = vld [vmem:[#allocation10 + $0x20] sm:$0xf]
    %v668 = vld [vmem:[#allocation10 + $0x24] sm:$0xf]
    %v669 = vld [vmem:[#allocation10 + $0x28] sm:$0xf]
    %v670 = vld [vmem:[#allocation10 + $0x2c] sm:$0xf]
    %v671 = vld [vmem:[#allocation10 + $0x30] sm:$0xf]
    %v672 = vld [vmem:[#allocation10 + $0x34] sm:$0xf]
    %v673 = vld [vmem:[#allocation10 + $0x38] sm:$0xf]
    %v674 = vld [vmem:[#allocation10 + $0x3c] sm:$0xf]
    %v675 = vld [vmem:[%s6] sm:$0x1]
    %v677 = vperm.slane %v675, 0
    %v695 = vunpack.c.l.b16 %v659
    %v696 = vunpack.c.l.b16 %v660
    %v697 = vunpack.c.l.b16 %v661
    %v698 = vunpack.c.l.b16 %v662
    %v699 = vunpack.c.l.b16 %v663
    %v700 = vunpack.c.l.b16 %v664
    %v701 = vunpack.c.l.b16 %v665
    %v702 = vunpack.c.l.b16 %v666
    %v703 = vunpack.c.l.b16 %v667
    %v704 = vunpack.c.l.b16 %v668
    %v705 = vunpack.c.l.b16 %v669
    %v706 = vunpack.c.l.b16 %v670
    %v707 = vunpack.c.l.b16 %v671
    %v708 = vunpack.c.l.b16 %v672
    %v709 = vunpack.c.l.b16 %v673
    %v710 = vunpack.c.l.b16 %v674
    %v711 = vpack.c.b16 %v696, %v695
    %v712 = vpack.c.b16 %v698, %v697
    %v713 = vpack.c.b16 %v700, %v699
    %v714 = vpack.c.b16 %v702, %v701
    %v715 = vpack.c.b16 %v704, %v703
    %v716 = vpack.c.b16 %v706, %v705
    %v717 = vpack.c.b16 %v708, %v707
    %v718 = vpack.c.b16 %v710, %v709
    %727 = vmatpush.bf16.msra.mxu0 %v718
    %728 = vmatpush.bf16.msra.mxu0 %v717
    %729 = vmatpush.bf16.msra.mxu0 %v716
    %730 = vmatpush.bf16.msra.mxu0 %v715
    %731 = vmatpush.bf16.msra.mxu0 %v714
    %732 = vmatpush.bf16.msra.mxu0 %v713
    %733 = vmatpush.bf16.msra.mxu0 %v712
    %734 = vmatpush.bf16.msra.mxu0 %v711
    %735 = vmatmul.bf16.gmra.mxu0 %v658
    %v736 = vpop.f32.mrf.mxu0
    %v737 = vadd.f32 %v677, %v736
    %v738 = vpop.f32.mrf.mxu0
    %v739 = vadd.f32 %v677, %v738
    %740 = vdwg.mxu0
    %741 = vst [vmem:[#allocation11] sm:$0xff] %v737
    %742 = vst [vmem:[#allocation11 + $0x8] sm:$0xff] %v739
    // Predicated region
    $region50: #{tpu_custom_call.1} parent=1 // pred_check
      _
    $region51: #{tpu_custom_call.1} parent=1 // pred_check_branch
      %744 = sbr.rel (0) target = $region53
    $region52: #{tpu_custom_call.1} parent=1 // pred_region
      %746 = vsyncadd [#allocation4], 0
      %s747 = sshll.u32 [#allocation11], 4
      %s748 = int_to_ptr.vmem [resolvable:$true] %s747
      %s749 = sshll.u32 %s7, 4
      %s750 = int_to_ptr.hbm [resolvable:$true] %s749
      %755 = dma.vmem_to_hbm [thread:$0]  %s748, 256, %s750, [#allocation4], 128, 128, 8
    $region53: #{tpu_custom_call.1} parent=1 // pred_fallthru
      _
    // Predicated region
    $region54: #{tpu_custom_call.1} parent=1 // pred_check
      _
    $region55: #{tpu_custom_call.1} parent=1 // pred_check_branch
      %757 = sbr.rel (0) target = $region57
    $region56: #{tpu_custom_call.1} parent=1 // pred_region
      %759 = dma.done [#allocation4], 256
    $region57: #{tpu_custom_call.1} parent=1 // pred_fallthru
      _
    %760 = vsyncpa [#allocation3], 1
    %761 = vsyncpa [#allocation6], 1
    %762 = vsyncpa [#allocation9], 1
    %763 = vsyncpa [#allocation4], 1

</llo_original>
